<compile_context>
chip_gen: v5e
topology: v5e:2x2
jax: 0.10.0
libtpu: 0.0.40
codegen_flags: <defaults>
</compile_context>

<pallas_src>
import jax
import jax.numpy as jnp
from jax.experimental import pallas as pl
from jax.experimental.pallas import tpu as pltpu


# ----------------------------------------------------------------------------
# small helpers
# ----------------------------------------------------------------------------
def _cdiv(a, b):
    return -(-a // b)


def _round_up(x, m):
    return _cdiv(x, m) * m


def _pick_tile(total, preferred):
    """Largest multiple-of-128 divisor of `total` that is <= `preferred`,
    otherwise `total` (full-dim block, always legal)."""
    t = min((preferred // 128) * 128, (total // 128) * 128)
    while t >= 128:
        if total % t == 0:
            return t
        t -= 128
    return total


def _choose_tm(m, preferred):
    """Row-tile size: multiple of 8 (sublane); >= 2 tiles when there is enough
    work so a 2-TensorCore chip (v7x) keeps both cores busy; capped at
    `preferred`."""
    preferred = max(8, (preferred // 8) * 8)
    if m <= preferred:
        if m >= 512:                       # enough rows: one tile per TC on v7x
            return _round_up(_cdiv(m, 2), 128)
        return _round_up(m, 8)
    return _round_up(_cdiv(m, _cdiv(m, preferred)), 128)


def _vmem_capacity_bytes():
    try:
        cap = getattr(pltpu.get_tpu_info(), "vmem_capacity_bytes", None)
        if cap:
            return int(cap)
    except Exception:           # host-side query only; never affects lowering
        pass
    return 64 * 1024 * 1024     # conservative (v7x-sized) fallback


def _resident_spec(shape, index_map, single_buffer):
    """Whole-array operand with a constant index map (DMA'd once). Request a
    single buffer where this JAX exposes pl.Buffered (halves its VMEM cost);
    otherwise fall back to the default double buffer."""
    if single_buffer and hasattr(pl, "Buffered"):
        try:
            return pl.BlockSpec(shape, index_map, pipeline_mode=pl.Buffered(1))
        except TypeError:       # pipeline_mode kwarg not available in this JAX
            pass
    return pl.BlockSpec(shape, index_map)


# ----------------------------------------------------------------------------
# exact GELU (erf form, torch.nn.GELU() default)
# ----------------------------------------------------------------------------
def _erf(x):
    # Abramowitz & Stegun 7.1.26, |abs error| < 1.5e-7 over the reals.
    # Uses only abs/exp/mul/add/where so it lowers in Mosaic without relying
    # on an erf primitive; accuracy is at f32 level.
    a1, a2, a3, a4, a5 = (0.254829592, -0.284496736, 1.421413741,
                          -1.453152027, 1.061405429)
    p = 0.3275911
    ax = jnp.abs(x)
    t = 1.0 / (1.0 + p * ax)
    poly = ((((a5 * t + a4) * t + a3) * t + a2) * t + a1) * t
    y = 1.0 - poly * jnp.exp(-(ax * ax))
    return jnp.where(x < 0.0, -y, y)


def _gelu_exact(x):
    # 0.5 * x * (1 + erf(x / sqrt(2)))  -- torch.nn.GELU() default
    return 0.5 * x * (1.0 + _erf(x * 0.7071067811865476))


# ----------------------------------------------------------------------------
# kernels
# ----------------------------------------------------------------------------
def _fused_kernel(x_ref, w1_ref, b1_ref, w2_ref, b2_ref, o_ref):
    """Grid: (row tiles,). All weights resident in VMEM; one output row tile
    per grid step (lane-dense full-width stores)."""
    cdt = w1_ref.dtype
    x = x_ref[...].astype(cdt)
    h = jnp.dot(x, w1_ref[...], preferred_element_type=jnp.float32)
    h = _gelu_exact(h + b1_ref[...])
    y = jnp.dot(h.astype(cdt), w2_ref[...], preferred_element_type=jnp.float32)
    o_ref[...] = (y + b2_ref[...]).astype(o_ref.dtype)


def _coltiled_kernel(x_ref, w1_ref, b1_ref, w2_ref, b2_ref, o_ref, h_ref):
    """Grid: (row tiles, Linear2 column tiles) -- used only when resident W2
    would not fit the VMEM budget.

    CORRECTNESS NOTE: axis 1 (j) MUST stay the innermost grid axis and be
    sequential ("arbitrary"): h_ref caches GELU(x@W1+b1) for the current row
    tile and is only (re)computed when j wraps to 0.
    """
    cdt = w1_ref.dtype

    @pl.when(pl.program_id(1) == 0)
    def _():
        x = x_ref[...].astype(cdt)
        h = jnp.dot(x, w1_ref[...], preferred_element_type=jnp.float32)
        h_ref[...] = _gelu_exact(h + b1_ref[...]).astype(h_ref.dtype)

    y = jnp.dot(h_ref[...], w2_ref[...], preferred_element_type=jnp.float32)
    o_ref[...] = (y + b2_ref[...]).astype(o_ref.dtype)


# ----------------------------------------------------------------------------
# host-side wrappers
# ----------------------------------------------------------------------------
def prepare_projector_params(w1, b1, w2, b2, *, mxu_dtype=jnp.bfloat16):
    """Cast / lay out the projector parameters ONCE (hoisted out of the
    per-call path).  Weights are stored (in_features, out_features) -- i.e.
    the transpose of torch nn.Linear.weight -- and biases become (1, n) f32."""
    cdt = jnp.dtype(mxu_dtype)
    return (jnp.asarray(w1, cdt),
            jnp.asarray(b1, jnp.float32).reshape(1, -1),
            jnp.asarray(w2, cdt),
            jnp.asarray(b2, jnp.float32).reshape(1, -1))


def projector_forward(x, w1, b1, w2, b2, *,
                      mxu_dtype=jnp.bfloat16,
                      tm=512, tn=512,
                      force_path=None,
                      single_buffer_weights=True,
                      xla_bypass_max_flops=0):
    """y = Linear2(GELU(Linear1(x))) with exact (erf) GELU.

    x: (..., d_in); w1: (d_in, h_mid); w2: (h_mid, h_out); biases 1-D or (1,n).
    Matmuls run in `mxu_dtype` with f32 accumulation (pass jnp.float32 for
    exact math).  Pre-cast the weights with prepare_projector_params so the
    cast is not redone on every call."""
    orig_shape = x.shape
    out_dtype = x.dtype
    d_in, h_mid = w1.shape
    h_out = w2.shape[1]
    assert w2.shape[0] == h_mid, "w2 must be (h_mid, h_out)"

    cdt = jnp.dtype(mxu_dtype)
    # These are no-ops when the params come from prepare_projector_params.
    w1c = jnp.asarray(w1).astype(cdt)
    w2c = jnp.asarray(w2).astype(cdt)
    b1c = jnp.asarray(b1, jnp.float32).reshape(1, h_mid)
    b2c = jnp.asarray(b2, jnp.float32).reshape(1, h_out)

    x2d = x.reshape(-1, d_in)
    m = x2d.shape[0]
    flops = 2 * m * (d_in * h_mid + h_mid * h_out)

    if xla_bypass_max_flops and flops <= xla_bypass_max_flops:
        # Tiny problems: a single fused XLA dot-gelu-dot beats pallas_call
        # fixed overhead.  Disabled by default so the kernel is exercised.
        h = jax.nn.gelu(
            jnp.dot(x2d.astype(cdt), w1c, preferred_element_type=jnp.float32) + b1c,
            approximate=False)
        y = jnp.dot(h.astype(cdt), w2c, preferred_element_type=jnp.float32) + b2c
        return y.astype(out_dtype).reshape(*orig_shape[:-1], h_out)

    # ---------------- tile / path / VMEM-budget selection ----------------
    xbytes = x2d.dtype.itemsize
    wbytes = cdt.itemsize
    obytes = jnp.dtype(out_dtype).itemsize
    vmem_cap = _vmem_capacity_bytes()
    budget = 0.5 * vmem_cap       # leave room for compiler-internal scratch
    single_buf = bool(single_buffer_weights and hasattr(pl, "Buffered"))
    wbuf_est = 2                  # estimate conservatively (as if double-buffered)

    def fused_need(tm_):
        return (2 * tm_ * d_in * xbytes
                + wbuf_est * ((d_in * h_mid + h_mid * h_out) * wbytes
                              + (h_mid + h_out) * 4)
                + 2 * tm_ * h_out * obytes
                + tm_ * h_mid * (4 + wbytes) + tm_ * h_out * 4)   # f32 temporaries

    def col_need(tm_, tn_):
        return (2 * tm_ * d_in * xbytes
                + wbuf_est * (d_in * h_mid * wbytes + h_mid * 4)
                + 2 * (h_mid * tn_ * wbytes + tn_ * 4)
                + 2 * tm_ * tn_ * obytes
                + tm_ * h_mid * (4 + wbytes) + tm_ * tn_ * 4)

    tm_eff = _choose_tm(m, tm)
    tn_eff = _pick_tile(h_out, tn)

    path = force_path
    if path is None:
        # Column-tile Linear2 only when resident W2 would blow the budget AND
        # h_out can actually be split into 128-aligned tiles.
        if fused_need(tm_eff) <= budget or tn_eff == h_out:
            path = "fused"
        else:
            path = "coltiled"

    need_fn = fused_need if path == "fused" else (lambda t: col_need(t, tn_eff))
    while need_fn(tm_eff) > budget and tm_eff > 128:
        tm_eff = max(128, _round_up(tm_eff // 2, 128))
    need = need_fn(tm_eff)

    vmem_limit = int(min(0.78 * vmem_cap,
                         max(32 * 1024 * 1024, 1.5 * need + (8 << 20))))

    # Row padding only when the row count is not a tile multiple.
    m_pad = _round_up(m, tm_eff)
    if m_pad != m:
        xq = jnp.zeros((m_pad, d_in), cdt).at[:m].set(x2d.astype(cdt))
    else:
        xq = x2d                     # cast to `cdt` happens inside the kernel

    cost = pl.CostEstimate(
        flops=int(flops),
        transcendentals=int(m * h_mid),          # one exp per erf
        bytes_accessed=int(m_pad * d_in * xq.dtype.itemsize
                           + (d_in * h_mid + h_mid * h_out) * wbytes
                           + (h_mid + h_out) * 4
                           + m_pad * h_out * obytes))

    if path == "fused":
        out = pl.pallas_call(
            _fused_kernel,
            out_shape=jax.ShapeDtypeStruct((m_pad, h_out), out_dtype),
            grid_spec=pltpu.PrefetchScalarGridSpec(
                num_scalar_prefetch=0,
                grid=(m_pad // tm_eff,),
                in_specs=[
                    pl.BlockSpec((tm_eff, d_in), lambda i: (i, 0)),
                    _resident_spec((d_in, h_mid), lambda i: (0, 0), single_buf),
                    _resident_spec((1, h_mid), lambda i: (0, 0), single_buf),
                    _resident_spec((h_mid, h_out), lambda i: (0, 0), single_buf),
                    _resident_spec((1, h_out), lambda i: (0, 0), single_buf),
                ],
                out_specs=pl.BlockSpec((tm_eff, h_out), lambda i: (i, 0)),
            ),
            compiler_params=pltpu.CompilerParams(
                dimension_semantics=("parallel",),
                vmem_limit_bytes=vmem_limit,
            ),
            cost_estimate=cost,
        )(xq, w1c, b1c, w2c, b2c)
    else:
        out = pl.pallas_call(
            _coltiled_kernel,
            out_shape=jax.ShapeDtypeStruct((m_pad, h_out), out_dtype),
            grid_spec=pltpu.PrefetchScalarGridSpec(
                num_scalar_prefetch=0,
                grid=(m_pad // tm_eff, h_out // tn_eff),
                in_specs=[
                    pl.BlockSpec((tm_eff, d_in), lambda i, j: (i, 0)),
                    _resident_spec((d_in, h_mid), lambda i, j: (0, 0), single_buf),
                    _resident_spec((1, h_mid), lambda i, j: (0, 0), single_buf),
                    pl.BlockSpec((h_mid, tn_eff), lambda i, j: (0, j)),
                    pl.BlockSpec((1, tn_eff), lambda i, j: (0, j)),
                ],
                out_specs=pl.BlockSpec((tm_eff, tn_eff), lambda i, j: (i, j)),
                scratch_shapes=[pltpu.VMEM((tm_eff, h_mid), cdt)],
            ),
            compiler_params=pltpu.CompilerParams(
                # j MUST remain innermost + sequential (see _coltiled_kernel).
                dimension_semantics=("parallel", "arbitrary"),
                vmem_limit_bytes=vmem_limit,
            ),
            cost_estimate=cost,
        )(xq, w1c, b1c, w2c, b2c)

    if m_pad != m:
        out = out[:m]
    return out.reshape(*orig_shape[:-1], h_out)


# ----------------------------------------------------------------------------
# demo / self-test
# ----------------------------------------------------------------------------
if __name__ == "__main__":
    # Config (synthetic): projector_type = "mlp2x_gelu"
    retriever_hidden_size = 32
    hidden_size = 64
    batch, seq = 2, 8

    key = jax.random.PRNGKey(0)
    k_x, k_w1, k_b1, k_w2, k_b2, k_x2 = jax.random.split(key, 6)

    x = jax.random.normal(k_x, (batch, seq, retriever_hidden_size), jnp.float32)
    w1 = jax.random.normal(k_w1, (retriever_hidden_size, hidden_size), jnp.float32) * 0.02
    b1 = jax.random.normal(k_b1, (hidden_size,), jnp.float32) * 0.01
    w2 = jax.random.normal(k_w2, (hidden_size, hidden_size), jnp.float32) * 0.02
    b2 = jax.random.normal(k_b2, (hidden_size,), jnp.float32) * 0.01

    def reference(xx):
        hp = jax.lax.Precision.HIGHEST
        h = jax.nn.gelu(jnp.dot(xx.reshape(-1, retriever_hidden_size), w1,
                                precision=hp) + b1, approximate=False)
        y = jnp.dot(h, w2, precision=hp) + b2
        return y.reshape(*xx.shape[:-1], hidden_size)

    ref = reference(x)

    # 1) exact path (f32 on the MXU) through BOTH grid structures.
    p32 = prepare_projector_params(w1, b1, w2, b2, mxu_dtype=jnp.float32)
    y_fused = jax.block_until_ready(
        projector_forward(x, *p32, mxu_dtype=jnp.float32, force_path="fused"))
    assert y_fused.shape == (batch, seq, hidden_size)
    assert jnp.allclose(y_fused, ref, atol=2e-5, rtol=1e-4), "fused f32 mismatch"

    y_col = jax.block_until_ready(
        projector_forward(x, *p32, mxu_dtype=jnp.float32, force_path="coltiled"))
    assert jnp.allclose(y_col, ref, atol=2e-5, rtol=1e-4), "coltiled f32 mismatch"

    # 2) default fast path: weights pre-cast once to bf16, auto path/tiling.
    pbf = prepare_projector_params(w1, b1, w2, b2)     # cached bf16 weights
    y = jax.block_until_ready(projector_forward(x, *pbf))
    assert y.shape == (batch, seq, hidden_size)
    assert jnp.allclose(y, ref, atol=5e-3, rtol=5e-2), "bf16 mismatch"

    # 3) multi-row-tile + row-padding path (m = 800 -> two 512-row tiles).
    x_big = jax.random.normal(k_x2, (4, 200, retriever_hidden_size), jnp.float32)
    y_big = jax.block_until_ready(projector_forward(x_big, *pbf))
    assert y_big.shape == (4, 200, hidden_size)
    assert jnp.allclose(y_big, reference(x_big), atol=5e-3, rtol=5e-2), "big bf16 mismatch"

    print("KERNEL_OK")
</pallas_src>

<mosaic_0001>
module attributes {stable_mosaic.version = 11 : i64} {
  func.func @_fused_kernel(%arg0: i32, %arg1: memref<16x32xf32, #tpu.memory_space<vmem>>, %arg2: memref<32x64xf32, #tpu.memory_space<vmem>>, %arg3: memref<1x64xf32, #tpu.memory_space<vmem>>, %arg4: memref<64x64xf32, #tpu.memory_space<vmem>>, %arg5: memref<1x64xf32, #tpu.memory_space<vmem>>, %arg6: memref<16x64xf32, #tpu.memory_space<vmem>>) attributes {dimension_semantics = [#tpu.dimension_semantics<parallel>], iteration_bounds = array<i64: 1>, scalar_prefetch = 0 : i64, scratch_operands = 0 : i64, tpu.core_type = #tpu.core_type<tc>, window_params = [{transform_indices = @transform_0, window_bounds = array<i64: 16, 32>}, {pipeline_mode = #tpu.pipeline_mode<synchronous>, transform_indices = @transform_1, window_bounds = array<i64: 32, 64>}, {pipeline_mode = #tpu.pipeline_mode<synchronous>, transform_indices = @transform_2, window_bounds = array<i64: 1, 64>}, {pipeline_mode = #tpu.pipeline_mode<synchronous>, transform_indices = @transform_3, window_bounds = array<i64: 64, 64>}, {pipeline_mode = #tpu.pipeline_mode<synchronous>, transform_indices = @transform_4, window_bounds = array<i64: 1, 64>}, {transform_indices = @transform_5, window_bounds = array<i64: 16, 64>}]} {
    %c0 = arith.constant 0 : index
    %c0_0 = arith.constant 0 : index
    %0 = vector.load %arg1[%c0, %c0_0] : memref<16x32xf32, #tpu.memory_space<vmem>>, vector<16x32xf32>
    %c0_1 = arith.constant 0 : index
    %c0_2 = arith.constant 0 : index
    %1 = vector.load %arg2[%c0_1, %c0_2] : memref<32x64xf32, #tpu.memory_space<vmem>>, vector<32x64xf32>
    %cst = arith.constant dense<0.000000e+00> : vector<16x64xf32>
    %2 = tpu.matmul %0, %1, %cst {dimension_numbers = #tpu.dot_dimension_numbers<[1], [0], [0], [1], [0, 0, 1, 1], [], []>} : vector<16x32xf32>, vector<32x64xf32>, vector<16x64xf32> -> vector<16x64xf32>
    %c0_3 = arith.constant 0 : index
    %c0_4 = arith.constant 0 : index
    %3 = vector.load %arg3[%c0_3, %c0_4] : memref<1x64xf32, #tpu.memory_space<vmem>>, vector<1x64xf32>
    %4 = vector.broadcast %3 : vector<1x64xf32> to vector<16x64xf32>
    %5 = arith.addf %2, %4 : vector<16x64xf32>
    %cst_5 = arith.constant 5.000000e-01 : f32
    %6 = vector.broadcast %cst_5 : f32 to vector<16x64xf32>
    %7 = arith.mulf %6, %5 : vector<16x64xf32>
    %cst_6 = arith.constant 0.707106769 : f32
    %8 = vector.broadcast %cst_6 : f32 to vector<16x64xf32>
    %9 = arith.mulf %5, %8 : vector<16x64xf32>
    %10 = math.absf %9 : vector<16x64xf32>
    %cst_7 = arith.constant 0.327591091 : f32
    %11 = vector.broadcast %cst_7 : f32 to vector<16x64xf32>
    %12 = arith.mulf %11, %10 : vector<16x64xf32>
    %cst_8 = arith.constant 1.000000e+00 : f32
    %13 = vector.broadcast %cst_8 : f32 to vector<16x64xf32>
    %14 = arith.addf %13, %12 : vector<16x64xf32>
    %cst_9 = arith.constant 1.000000e+00 : f32
    %15 = vector.broadcast %cst_9 : f32 to vector<16x64xf32>
    %16 = arith.divf %15, %14 : vector<16x64xf32>
    %cst_10 = arith.constant 1.06140542 : f32
    %17 = vector.broadcast %cst_10 : f32 to vector<16x64xf32>
    %18 = arith.mulf %17, %16 : vector<16x64xf32>
    %cst_11 = arith.constant -1.45315206 : f32
    %19 = vector.broadcast %cst_11 : f32 to vector<16x64xf32>
    %20 = arith.addf %18, %19 : vector<16x64xf32>
    %21 = arith.mulf %20, %16 : vector<16x64xf32>
    %cst_12 = arith.constant 1.42141378 : f32
    %22 = vector.broadcast %cst_12 : f32 to vector<16x64xf32>
    %23 = arith.addf %21, %22 : vector<16x64xf32>
    %24 = arith.mulf %23, %16 : vector<16x64xf32>
    %cst_13 = arith.constant -0.284496725 : f32
    %25 = vector.broadcast %cst_13 : f32 to vector<16x64xf32>
    %26 = arith.addf %24, %25 : vector<16x64xf32>
    %27 = arith.mulf %26, %16 : vector<16x64xf32>
    %cst_14 = arith.constant 0.254829586 : f32
    %28 = vector.broadcast %cst_14 : f32 to vector<16x64xf32>
    %29 = arith.addf %27, %28 : vector<16x64xf32>
    %30 = arith.mulf %29, %16 : vector<16x64xf32>
    %31 = arith.mulf %10, %10 : vector<16x64xf32>
    %cst_15 = arith.constant 0.000000e+00 : f32
    %32 = vector.broadcast %cst_15 : f32 to vector<16x64xf32>
    %33 = arith.subf %32, %31 : vector<16x64xf32>
    %34 = math.exp %33 : vector<16x64xf32>
    %35 = arith.mulf %30, %34 : vector<16x64xf32>
    %cst_16 = arith.constant 1.000000e+00 : f32
    %36 = vector.broadcast %cst_16 : f32 to vector<16x64xf32>
    %37 = arith.subf %36, %35 : vector<16x64xf32>
    %cst_17 = arith.constant 0.000000e+00 : f32
    %38 = vector.broadcast %cst_17 : f32 to vector<16x64xf32>
    %39 = arith.cmpf olt, %9, %38 : vector<16x64xf32>
    %cst_18 = arith.constant 0.000000e+00 : f32
    %40 = vector.broadcast %cst_18 : f32 to vector<16x64xf32>
    %41 = arith.subf %40, %37 : vector<16x64xf32>
    %42 = arith.select %39, %41, %37 : vector<16x64xi1>, vector<16x64xf32>
    %cst_19 = arith.constant 1.000000e+00 : f32
    %43 = vector.broadcast %cst_19 : f32 to vector<16x64xf32>
    %44 = arith.addf %43, %42 : vector<16x64xf32>
    %45 = arith.mulf %7, %44 : vector<16x64xf32>
    %c0_20 = arith.constant 0 : index
    %c0_21 = arith.constant 0 : index
    %46 = vector.load %arg4[%c0_20, %c0_21] : memref<64x64xf32, #tpu.memory_space<vmem>>, vector<64x64xf32>
    %cst_22 = arith.constant dense<0.000000e+00> : vector<16x64xf32>
    %47 = tpu.matmul %45, %46, %cst_22 {dimension_numbers = #tpu.dot_dimension_numbers<[1], [0], [0], [1], [0, 0, 1, 1], [], []>} : vector<16x64xf32>, vector<64x64xf32>, vector<16x64xf32> -> vector<16x64xf32>
    %c0_23 = arith.constant 0 : index
    %c0_24 = arith.constant 0 : index
    %48 = vector.load %arg5[%c0_23, %c0_24] : memref<1x64xf32, #tpu.memory_space<vmem>>, vector<1x64xf32>
    %49 = vector.broadcast %48 : vector<1x64xf32> to vector<16x64xf32>
    %50 = arith.addf %47, %49 : vector<16x64xf32>
    %c0_25 = arith.constant 0 : index
    %c0_26 = arith.constant 0 : index
    %51 = vector.load %arg6[%c0_25, %c0_26] : memref<16x64xf32, #tpu.memory_space<vmem>>, vector<16x64xf32>
    tpu.vector_store %arg6[%c0_25, %c0_26], %50 {strides = array<i32>} : memref<16x64xf32, #tpu.memory_space<vmem>>, vector<16x64xf32>,
    return
  }
  func.func @transform_0(%arg0: i32) -> (i32, i32) {
    %c0_i32 = arith.constant 0 : i32
    %c0_i32_0 = arith.constant 0 : i32
    return %arg0, %c0_i32 : i32, i32
  }
  func.func @transform_1(%arg0: i32) -> (i32, i32) {
    %c0_i32 = arith.constant 0 : i32
    %c0_i32_0 = arith.constant 0 : i32
    %c0_i32_1 = arith.constant 0 : i32
    return %c0_i32, %c0_i32_0 : i32, i32
  }
  func.func @transform_2(%arg0: i32) -> (i32, i32) {
    %c0_i32 = arith.constant 0 : i32
    %c0_i32_0 = arith.constant 0 : i32
    %c0_i32_1 = arith.constant 0 : i32
    return %c0_i32, %c0_i32_0 : i32, i32
  }
  func.func @transform_3(%arg0: i32) -> (i32, i32) {
    %c0_i32 = arith.constant 0 : i32
    %c0_i32_0 = arith.constant 0 : i32
    %c0_i32_1 = arith.constant 0 : i32
    return %c0_i32, %c0_i32_0 : i32, i32
  }
  func.func @transform_4(%arg0: i32) -> (i32, i32) {
    %c0_i32 = arith.constant 0 : i32
    %c0_i32_0 = arith.constant 0 : i32
    %c0_i32_1 = arith.constant 0 : i32
    return %c0_i32, %c0_i32_0 : i32, i32
  }
  func.func @transform_5(%arg0: i32) -> (i32, i32) {
    %c0_i32 = arith.constant 0 : i32
    %c0_i32_0 = arith.constant 0 : i32
    return %arg0, %c0_i32 : i32, i32
  }
}

</mosaic_0001>

<llo_original>
// kernel: tpu_custom_call.1
$region0: #{tpu_custom_call.1}
  #allocation0 [shape = 'u32[]', space=smem, size = 0x4, offset = 0x4, fixed_abs, tag = 'smem constant byte address 0x4 - core index']
  #allocation1 [shape = 'u32[72,128]{1,0:T(1,128)}', space=vmem, size = 0x9000, scoped, tag = 'internal scratch']
  %s0 = inlined_call_operand.hbm [shape: f32[16,32], index: 0, kind: input, shape index: {}]
  %s1 = inlined_call_operand.hbm [shape: f32[32,64], index: 1, kind: input, shape index: {}]
  %s2 = inlined_call_operand.vmem [shape: f32[1,64], index: 2, kind: input, shape index: {}]
  %s3 = inlined_call_operand.hbm [shape: f32[64,64], index: 3, kind: input, shape index: {}]
  %s4 = inlined_call_operand.vmem [shape: f32[1,64], index: 4, kind: input, shape index: {}]
  %s5 = inlined_call_operand.hbm [shape: f32[16,64], index: 5, kind: output, shape index: {}]
  %s6 = sld [smem:[#allocation0]]
  $region42: #{tpu_custom_call.1} parent=0
    _
  %s8 = ssub.s32 1, %s6
  %s9 = scalar_select 0, %s8, %s6
  $region1: #{tpu_custom_call.1} parent=0
    #allocation2 [shape = 'u8[8192]{0}', space=vmem, size = 0x2000, scoped, tag = 'input window, operand 0, single buffered']
    #allocation3 [shape = 's32[1]{0}', space=sflag, size = 0x4, scoped, tag = 'scoped memory for tpu_custom_call.1']
    #allocation4 [shape = 's32[1]{0}', space=sflag, size = 0x4, scoped, tag = 'scoped memory for tpu_custom_call.1']
    #allocation5 [shape = 'u8[16384]{0}', space=vmem, size = 0x4000, scoped, tag = 'input window, operand 1, single buffered']
    #allocation6 [shape = 's32[1]{0}', space=sflag, size = 0x4, scoped, tag = 'scoped memory for tpu_custom_call.1']
    #allocation7 [shape = 'u8[32768]{0}', space=vmem, size = 0x8000, scoped, tag = 'input window, operand 3, single buffered']
    #allocation8 [shape = 'u8[8192]{0}', space=vmem, size = 0x2000, scoped, tag = 'output window, operand 0, single buffered']
    %10 = vsyncpa [#allocation3], 0
    %11 = vsyncpa [#allocation6], 0
    %12 = vsyncpa [#allocation4], 0
    // Predicated region
    $region2: #{tpu_custom_call.1} parent=1 // pred_check
      _
    $region3: #{tpu_custom_call.1} parent=1 // pred_check_branch
      %14 = sbr.rel (0) target = $region5
    $region4: #{tpu_custom_call.1} parent=1 // pred_region
      %16 = vsyncadd [#allocation3], 0
      %s17 = sshll.u32 %s0, 4
      %s18 = int_to_ptr.hbm [resolvable:$true] %s17
      %s19 = sshll.u32 [#allocation2], 4
      %s20 = int_to_ptr.vmem [resolvable:$true] %s19
      %25 = dma.hbm_to_vmem [thread:$0]  %s18, 256, %s20, [#allocation3], 128, 128, 8
    $region5: #{tpu_custom_call.1} parent=1 // pred_fallthru
      _
    // Predicated region
    $region6: #{tpu_custom_call.1} parent=1 // pred_check
      _
    $region7: #{tpu_custom_call.1} parent=1 // pred_check_branch
      %27 = sbr.rel (0) target = $region9
    $region8: #{tpu_custom_call.1} parent=1 // pred_region
      %29 = vsyncadd [#allocation6], 0
      %s30 = sshll.u32 %s1, 4
      %s31 = int_to_ptr.hbm [resolvable:$true] %s30
      %s32 = sshll.u32 [#allocation5], 4
      %s33 = int_to_ptr.vmem [resolvable:$true] %s32
      %38 = dma.hbm_to_vmem [thread:$0]  %s31, 512, %s33, [#allocation6], 128, 128, 8
    $region9: #{tpu_custom_call.1} parent=1 // pred_fallthru
      _
    // Predicated region
    $region10: #{tpu_custom_call.1} parent=1 // pred_check
      _
    $region11: #{tpu_custom_call.1} parent=1 // pred_check_branch
      %40 = sbr.rel (0) target = $region13
    $region12: #{tpu_custom_call.1} parent=1 // pred_region
      _
    $region13: #{tpu_custom_call.1} parent=1 // pred_fallthru
      _
    // Predicated region
    $region14: #{tpu_custom_call.1} parent=1 // pred_check
      _
    $region15: #{tpu_custom_call.1} parent=1 // pred_check_branch
      %42 = sbr.rel (0) target = $region17
    $region16: #{tpu_custom_call.1} parent=1 // pred_region
      %44 = vsyncadd [#allocation6], 0
      %s45 = sshll.u32 %s3, 4
      %s46 = int_to_ptr.hbm [resolvable:$true] %s45
      %s47 = sshll.u32 [#allocation7], 4
      %s48 = int_to_ptr.vmem [resolvable:$true] %s47
      %53 = dma.hbm_to_vmem [thread:$0]  %s46, 1024, %s48, [#allocation6], 128, 128, 8
    $region17: #{tpu_custom_call.1} parent=1 // pred_fallthru
      _
    // Predicated region
    $region18: #{tpu_custom_call.1} parent=1 // pred_check
      _
    $region19: #{tpu_custom_call.1} parent=1 // pred_check_branch
      %55 = sbr.rel (0) target = $region21
    $region20: #{tpu_custom_call.1} parent=1 // pred_region
      _
    $region21: #{tpu_custom_call.1} parent=1 // pred_fallthru
      _
    // Predicated region
    $region22: #{tpu_custom_call.1} parent=1 // pred_check
      _
    $region23: #{tpu_custom_call.1} parent=1 // pred_check_branch
      %57 = sbr.rel (0) target = $region25
    $region24: #{tpu_custom_call.1} parent=1 // pred_region
      %59 = dma.done [#allocation3], 256
    $region25: #{tpu_custom_call.1} parent=1 // pred_fallthru
      _
    // Predicated region
    $region26: #{tpu_custom_call.1} parent=1 // pred_check
      _
    $region27: #{tpu_custom_call.1} parent=1 // pred_check_branch
      %61 = sbr.rel (0) target = $region29
    $region28: #{tpu_custom_call.1} parent=1 // pred_region
      %63 = dma.done [#allocation6], 512
    $region29: #{tpu_custom_call.1} parent=1 // pred_fallthru
      _
    // Predicated region
    $region30: #{tpu_custom_call.1} parent=1 // pred_check
      _
    $region31: #{tpu_custom_call.1} parent=1 // pred_check_branch
      %65 = sbr.rel (0) target = $region33
    $region32: #{tpu_custom_call.1} parent=1 // pred_region
      %67 = dma.done [#allocation6], 1024
    $region33: #{tpu_custom_call.1} parent=1 // pred_fallthru
      _
    %v68 = vld [vmem:[#allocation2] sm:$0xff]
    %v69 = vld [vmem:[#allocation2 + $0x8] sm:$0xff]
    %v70 = vld [vmem:[#allocation5] sm:$0xff]
    %v71 = vld [vmem:[#allocation5 + $0x8] sm:$0xff]
    %v72 = vld [vmem:[#allocation5 + $0x10] sm:$0xff]
    %v73 = vld [vmem:[#allocation5 + $0x18] sm:$0xff]
    %v74 = vld [vmem:[%s2] sm:$0x1]
    %v76 = vperm.slane %v74, 0
    %vm78 = vcmask 261120
    %v80 = vsel %vm78, %v68, 0
    %v83 = vsel %vm78, %v69, 0
    %85 = vmatpush.msra.mxu0 0.0
    %86 = vmatpush.msra.mxu0 0.0
    %87 = vmatpush.msra.mxu0 0.0
    %88 = vmatpush.msra.mxu0 0.0
    %89 = vmatpush.msra.mxu0 0.0
    %90 = vmatpush.msra.mxu0 0.0
    %91 = vmatpush.msra.mxu0 0.0
    %92 = vmatpush.msra.mxu0 0.0
    %93 = vmatpush.msra.mxu0 0.0
    %94 = vmatpush.msra.mxu0 0.0
    %95 = vmatpush.msra.mxu0 0.0
    %96 = vmatpush.msra.mxu0 0.0
    %97 = vmatpush.msra.mxu0 %v73
    %98 = vmatpush.msra.mxu0 %v72
    %99 = vmatpush.msra.mxu0 %v71
    %100 = vmatpush.msra.mxu0 %v70
    %101 = vmatmul.f32.gmra.mxu0 %v80
    %v102 = vpop.f32.mrf.mxu0
    %v103 = vadd.f32 %v76, %v102
    %104 = vmatmul.f32.gmra.mxu0 %v83
    %v105 = vpop.f32.mrf.mxu0
    %v106 = vadd.f32 %v76, %v105
    %107 = vdwg.mxu0
    %v108 = vmul.f32 %v103, 0.5
    %v109 = vmul.f32 %v106, 0.5
    %v110 = vmul.f32 %v103, 0.70710677
    %v111 = vmul.f32 %v106, 0.70710677
    %v112 = vand.u32 2147483647, %v110
    %v113 = vand.u32 2147483647, %v111
    %v114 = vmul.f32 %v112, 0.3275911
    %v115 = vmul.f32 %v113, 0.3275911
    %v116 = vadd.f32 %v114, 1.0
    %v117 = vadd.f32 %v115, 1.0
    %v118 = vrcp.pop %v116
    %v119 = vmul.f32 %v116, %v118
    %v120 = vsub.f32 1.0, %v119
    %v121 = vmul.f32 %v118, %v120
    %v122 = vadd.f32 %v118, %v121
    %vm123 = vweird.f32 %v116
    %vm124 = vweird.f32 %v118
    %vm125 = vmor %vm123, %vm124
    %v126 = vsel %vm125, %v118, %v122
    %v127 = vand.u32 2147483647, %v116
    %vm128 = vcmp.eq.f32.partialorder %v127, 8.507059e+37
    %v129 = vand.u32 %v116, 2147483648
    %v130 = vor.u32 1.1754944e-38, %v129
    %v131 = vsel %vm128, %v130, %v126
    %v132 = vmul.f32 1.0, %v131
    %v133 = vrcp.pop %v117
    %v134 = vmul.f32 %v117, %v133
    %v135 = vsub.f32 1.0, %v134
    %v136 = vmul.f32 %v133, %v135
    %v137 = vadd.f32 %v133, %v136
    %vm138 = vweird.f32 %v117
    %vm139 = vweird.f32 %v133
    %vm140 = vmor %vm138, %vm139
    %v141 = vsel %vm140, %v133, %v137
    %v142 = vand.u32 2147483647, %v117
    %vm143 = vcmp.eq.f32.partialorder %v142, 8.507059e+37
    %v144 = vand.u32 %v117, 2147483648
    %v145 = vor.u32 1.1754944e-38, %v144
    %v146 = vsel %vm143, %v145, %v141
    %v147 = vmul.f32 1.0, %v146
    %v148 = vmul.f32 %v132, 1.0614054
    %v149 = vmul.f32 %v147, 1.0614054
    %v150 = vadd.f32 %v148, -1.4531521
    %v151 = vadd.f32 %v149, -1.4531521
    %v152 = vmul.f32 %v150, %v132
    %v153 = vmul.f32 %v151, %v147
    %v154 = vadd.f32 %v152, 1.4214138
    %v155 = vadd.f32 %v153, 1.4214138
    %v156 = vmul.f32 %v154, %v132
    %v157 = vmul.f32 %v155, %v147
    %v158 = vadd.f32 %v156, -0.28449672
    %v159 = vadd.f32 %v157, -0.28449672
    %v160 = vmul.f32 %v158, %v132
    %v161 = vmul.f32 %v159, %v147
    %v162 = vadd.f32 %v160, 0.2548296
    %v163 = vadd.f32 %v161, 0.2548296
    %v164 = vmul.f32 %v162, %v132
    %v165 = vmul.f32 %v163, %v147
    %v166 = vmul.f32 %v112, %v112
    %v167 = vmul.f32 %v113, %v113
    %v168 = vsub.f32 0.0, %v166
    %v169 = vsub.f32 0.0, %v167
    %v170 = vmul.f32 %v168, 1.442695
    %v171 = vpow.pop %v170
    %v172 = vmul.f32 %v169, 1.442695
    %v173 = vpow.pop %v172
    %v174 = vmul.f32 %v164, %v171
    %v175 = vmul.f32 %v165, %v173
    %v176 = vsub.f32 1.0, %v174
    %v177 = vsub.f32 1.0, %v175
    %vm178 = vcmp.lt.f32.partialorder %v110, 0.0
    %vm179 = vcmp.lt.f32.partialorder %v111, 0.0
    %v180 = vsub.f32 0.0, %v176
    %v181 = vsub.f32 0.0, %v177
    %v182 = vsel %vm178, %v180, %v176
    %v183 = vsel %vm179, %v181, %v177
    %v184 = vadd.f32 %v182, 1.0
    %v185 = vadd.f32 %v183, 1.0
    %v186 = vmul.f32 %v108, %v184
    %v187 = vmul.f32 %v109, %v185
    %v188 = vld [vmem:[#allocation7] sm:$0xff]
    %v189 = vld [vmem:[#allocation7 + $0x8] sm:$0xff]
    %v190 = vld [vmem:[#allocation7 + $0x10] sm:$0xff]
    %v191 = vld [vmem:[#allocation7 + $0x18] sm:$0xff]
    %v192 = vld [vmem:[#allocation7 + $0x20] sm:$0xff]
    %v193 = vld [vmem:[#allocation7 + $0x28] sm:$0xff]
    %v194 = vld [vmem:[#allocation7 + $0x30] sm:$0xff]
    %v195 = vld [vmem:[#allocation7 + $0x38] sm:$0xff]
    %v196 = vld [vmem:[%s4] sm:$0x1]
    %v198 = vperm.slane %v196, 0
    %vm200 = vcmask 523264
    %v202 = vsel %vm200, %v186, 0
    %v205 = vsel %vm200, %v187, 0
    %207 = vmatpush.msra.mxu0 0.0
    %208 = vmatpush.msra.mxu0 0.0
    %209 = vmatpush.msra.mxu0 0.0
    %210 = vmatpush.msra.mxu0 0.0
    %211 = vmatpush.msra.mxu0 0.0
    %212 = vmatpush.msra.mxu0 0.0
    %213 = vmatpush.msra.mxu0 0.0
    %214 = vmatpush.msra.mxu0 0.0
    %215 = vmatpush.msra.mxu0 %v195
    %216 = vmatpush.msra.mxu0 %v194
    %217 = vmatpush.msra.mxu0 %v193
    %218 = vmatpush.msra.mxu0 %v192
    %219 = vmatpush.msra.mxu0 %v191
    %220 = vmatpush.msra.mxu0 %v190
    %221 = vmatpush.msra.mxu0 %v189
    %222 = vmatpush.msra.mxu0 %v188
    %223 = vmatmul.f32.gmra.mxu0 %v202
    %v224 = vpop.f32.mrf.mxu0
    %v225 = vadd.f32 %v198, %v224
    %226 = vmatmul.f32.gmra.mxu0 %v205
    %v227 = vpop.f32.mrf.mxu0
    %v228 = vadd.f32 %v198, %v227
    %229 = vdwg.mxu0
    %230 = vst.msk [vmem:[#allocation8] sm:$0xff] %vm200, %v225
    %231 = vst.msk [vmem:[#allocation8 + $0x8] sm:$0xff] %vm200, %v228
    // Predicated region
    $region34: #{tpu_custom_call.1} parent=1 // pred_check
      _
    $region35: #{tpu_custom_call.1} parent=1 // pred_check_branch
      %233 = sbr.rel (0) target = $region37
    $region36: #{tpu_custom_call.1} parent=1 // pred_region
      %235 = vsyncadd [#allocation4], 0
      %s236 = sshll.u32 [#allocation8], 4
      %s237 = int_to_ptr.vmem [resolvable:$true] %s236
      %s238 = sshll.u32 %s5, 4
      %s239 = int_to_ptr.hbm [resolvable:$true] %s238
      %244 = dma.vmem_to_hbm [thread:$0]  %s237, 256, %s239, [#allocation4], 128, 128, 8
    $region37: #{tpu_custom_call.1} parent=1 // pred_fallthru
      _
    // Predicated region
    $region38: #{tpu_custom_call.1} parent=1 // pred_check
      _
    $region39: #{tpu_custom_call.1} parent=1 // pred_check_branch
      %246 = sbr.rel (0) target = $region41
    $region40: #{tpu_custom_call.1} parent=1 // pred_region
      %248 = dma.done [#allocation4], 256
    $region41: #{tpu_custom_call.1} parent=1 // pred_fallthru
      _
    %249 = vsyncpa [#allocation3], 1
    %250 = vsyncpa [#allocation6], 1
    %251 = vsyncpa [#allocation4], 1

</llo_original>
